<compile_context>
chip_gen: v7x
topology: tpu7x:2x2x1
jax: 0.10.0
libtpu: 0.0.40
codegen_flags: <defaults>
</compile_context>

<pallas_src>
import jax
import jax.numpy as jnp
from jax.experimental import pallas as pl
from jax.experimental.pallas import tpu as pltpu


_LANE = 128
_SUBLANE = 8


def _round_up(x, m):
    return (x + m - 1) // m * m


# ----------------------------- fused kernel --------------------------------

def _make_fused_kernel(B, Bp, HWp, D3, cdt):
    """Fused (folded conv) + flatten + 3-layer-MLP kernel for static shapes."""
    FLAT = D3 * HWp

    def kernel(x_ref, wf_ref, fw1_ref, fb1_ref, fw2_ref, fb2_ref,
               fw3_ref, fb3_ref, o_ref, flat_ref):
        # ---- conv stack: three bias-free Conv3d pre-folded into ONE matmul ----
        # wf = w3 @ w2 @ w1 ;  x_ref: (CT, B*HWp) with per-batch zero-padded
        # HW -> HWp lanes, so the pad lanes of y are true zeros.
        y = jnp.dot(wf_ref[...], x_ref[...],
                    preferred_element_type=jnp.float32).astype(cdt)

        # ---- flatten 'B T(=1) C H W -> B (C H W)' ----
        # All copies are 128-aligned, 128-wide unmasked lane moves; only the
        # (Bp - B) pad batch rows need a (single, tiny) zero store.
        if Bp > B:
            flat_ref[pl.ds(B, Bp - B), :] = jnp.zeros((Bp - B, FLAT), cdt)
        for b in range(B):
            for d in range(D3):
                flat_ref[pl.ds(b, 1), pl.ds(d * HWp, HWp)] = (
                    y[d:d + 1, b * HWp:(b + 1) * HWp])

        # ---- MLP encoder: 3 x (Linear + ReLU), widths padded to 128 lanes ----
        # matmuls accumulate in f32; bias-add / ReLU stay in f32 (v5e-safe).
        h = jnp.dot(flat_ref[...], fw1_ref[...],
                    preferred_element_type=jnp.float32)
        h = jnp.maximum(h + fb1_ref[...], 0.0)
        h = jnp.dot(h.astype(cdt), fw2_ref[...],
                    preferred_element_type=jnp.float32)
        h = jnp.maximum(h + fb2_ref[...], 0.0)
        h = jnp.dot(h.astype(cdt), fw3_ref[...],
                    preferred_element_type=jnp.float32)
        o_ref[...] = jnp.maximum(h + fb3_ref[...], 0.0)

    return kernel


# ------------------------------ wrapper -------------------------------------

def cond_module_forward(feats, params, *, compute_dtype=jnp.bfloat16):
    """Full CondModule forward (after backbone).

    feats : (B, C0*T, H*W) float32 backbone features.
    params: (w1, w2, w3, fw1, fb1, fw2, fb2, fw3, fb3) with conv weights
            (out, in) and MLP weights (in, out) / biases (1, out).
    """
    w1, w2, w3, fw1, fb1, fw2, fb2, fw3, fb3 = params
    B, CT, HW = feats.shape
    D3 = w3.shape[0]
    h1, h2, h3 = fw1.shape[1], fw2.shape[1], fw3.shape[1]
    assert fw1.shape[0] == D3 * HW

    HWp = _round_up(HW, _LANE)                         # 128-aligned segments
    Bp = _round_up(B, _SUBLANE)                        # full-tile output rows
    h1p, h2p, h3p = (_round_up(h, _LANE) for h in (h1, h2, h3))

    f32 = jnp.float32
    cdt = compute_dtype

    # --- wrapper-side layout plumbing (plain XLA, done once) ---
    # Fold the three bias-free convs into one matrix (exact; done in f32).
    wfold = (w3.astype(f32) @ w2.astype(f32) @ w1.astype(f32))      # (D3, CT)

    # Lane-dense, per-batch zero-padded activation layout: (CT, B*HWp).
    xT = jnp.transpose(feats, (1, 0, 2))                            # (CT, B, HW)
    xT = jnp.pad(xT, ((0, 0), (0, 0), (0, HWp - HW)))               # (CT, B, HWp)
    xT = xT.reshape(CT, B * HWp)

    # Re-pack MLP weights: fw1 rows (d3, hw) -> (d3, HWp) 128-aligned segments
    # (zero rows in the hw-pad region); pad all hidden/output widths to 128.
    fw1_3d = fw1.reshape(D3, HW, h1)
    fw1_p = (jnp.zeros((D3, HWp, h1p), f32)
             .at[:, :HW, :h1].set(fw1_3d.astype(f32))
             .reshape(D3 * HWp, h1p))
    fb1_p = jnp.zeros((1, h1p), f32).at[:, :h1].set(fb1.astype(f32))
    fw2_p = jnp.zeros((h1p, h2p), f32).at[:h1, :h2].set(fw2.astype(f32))
    fb2_p = jnp.zeros((1, h2p), f32).at[:, :h2].set(fb2.astype(f32))
    fw3_p = jnp.zeros((h2p, h3p), f32).at[:h2, :h3].set(fw3.astype(f32))
    fb3_p = jnp.zeros((1, h3p), f32).at[:, :h3].set(fb3.astype(f32))

    kernel = _make_fused_kernel(B, Bp, HWp, D3, cdt)
    vmem_spec = pl.BlockSpec(memory_space=pltpu.MemorySpace.VMEM)

    out_p = pl.pallas_call(
        kernel,
        out_shape=jax.ShapeDtypeStruct((Bp, h3p), jnp.float32),
        in_specs=[vmem_spec] * 8,
        out_specs=vmem_spec,
        scratch_shapes=[
            pltpu.VMEM((Bp, D3 * HWp), cdt),     # flattened MLP input
        ],
        compiler_params=pltpu.CompilerParams(
            vmem_limit_bytes=64 * 1024 * 1024),
    )(
        xT.astype(cdt),
        wfold.astype(cdt),
        fw1_p.astype(cdt), fb1_p,
        fw2_p.astype(cdt), fb2_p,
        fw3_p.astype(cdt), fb3_p,
    )
    return out_p[:B, :h3]


# ------------------------------ reference -----------------------------------

def reference(feats, params):
    (w1, w2, w3, fw1, fb1, fw2, fb2, fw3, fb3) = params
    y = jnp.einsum('ij,bjs->bis', w1, feats)
    y = jnp.einsum('ij,bjs->bis', w2, y)
    y = jnp.einsum('ij,bjs->bis', w3, y)
    flat = y.reshape(y.shape[0], -1)
    h = jax.nn.relu(flat @ fw1 + fb1)
    h = jax.nn.relu(h @ fw2 + fb2)
    h = jax.nn.relu(h @ fw3 + fb3)
    return h


# -------------------------------- main ---------------------------------------

if __name__ == "__main__":
    # Small shapes consistent with the module (conv_drop_dim=3 path, scaled down):
    B = 2
    T = 4                       # demo_T
    C0 = 32                     # backbone channels (256 in the real model)
    H = W = 7                   # demo_H = demo_W = 7
    demo_ff_dim = [16, 16, 8]   # 3D-conv output channels (128/64/32 real)
    demo_linear_dim = [64, 32, 16]
    HW = H * W
    CT = C0 * T
    lin_in = demo_ff_dim[-1] * H * W

    key = jax.random.PRNGKey(0)
    ks = jax.random.split(key, 10)

    # Backbone output features, already rearranged B C T H W -> (B, C*T, H*W).
    feats = jax.random.normal(ks[0], (B, CT, HW), dtype=jnp.float32)

    # Conv3d weights (no bias). conv1 kernel (T,1,1) flattened to (D1, C0*T);
    # conv2/conv3 kernel (1,1,1) -> plain (out, in) matrices.
    scale = 0.1
    w1 = scale * jax.random.normal(ks[1], (demo_ff_dim[0], CT), dtype=jnp.float32)
    w2 = scale * jax.random.normal(ks[2], (demo_ff_dim[1], demo_ff_dim[0]), dtype=jnp.float32)
    w3 = scale * jax.random.normal(ks[3], (demo_ff_dim[2], demo_ff_dim[1]), dtype=jnp.float32)

    # MLP Linear weights stored as (in, out), biases as (1, out).
    fw1 = scale * jax.random.normal(ks[4], (lin_in, demo_linear_dim[0]), dtype=jnp.float32)
    fb1 = scale * jax.random.normal(ks[5], (1, demo_linear_dim[0]), dtype=jnp.float32)
    fw2 = scale * jax.random.normal(ks[6], (demo_linear_dim[0], demo_linear_dim[1]), dtype=jnp.float32)
    fb2 = scale * jax.random.normal(ks[7], (1, demo_linear_dim[1]), dtype=jnp.float32)
    fw3 = scale * jax.random.normal(ks[8], (demo_linear_dim[1], demo_linear_dim[2]), dtype=jnp.float32)
    fb3 = scale * jax.random.normal(ks[9], (1, demo_linear_dim[2]), dtype=jnp.float32)

    params = (w1, w2, w3, fw1, fb1, fw2, fb2, fw3, fb3)

    ref = jax.block_until_ready(reference(feats, params))

    # f32 path: tight check of the fused kernel semantics.
    out_f32 = jax.block_until_ready(
        cond_module_forward(feats, params, compute_dtype=jnp.float32))
    assert out_f32.shape == (B, demo_linear_dim[-1]), out_f32.shape
    assert jnp.allclose(out_f32, ref, rtol=1e-4, atol=1e-4), \
        float(jnp.max(jnp.abs(out_f32 - ref)))

    # bf16-operand / f32-accumulation path (v6e / v7x fast path): loose check.
    out_bf16 = jax.block_until_ready(
        cond_module_forward(feats, params, compute_dtype=jnp.bfloat16))
    assert out_bf16.shape == (B, demo_linear_dim[-1]), out_bf16.shape
    assert jnp.allclose(out_bf16, ref, rtol=5e-2, atol=5e-2), \
        float(jnp.max(jnp.abs(out_bf16 - ref)))

    print("KERNEL_OK")
</pallas_src>

<mosaic_0001>
module attributes {stable_mosaic.version = 11 : i64} {
  func.func @kernel(%arg0: memref<128x256xf32, #tpu.memory_space<vmem>>, %arg1: memref<8x128xf32, #tpu.memory_space<vmem>>, %arg2: memref<1024x128xf32, #tpu.memory_space<vmem>>, %arg3: memref<1x128xf32, #tpu.memory_space<vmem>>, %arg4: memref<128x128xf32, #tpu.memory_space<vmem>>, %arg5: memref<1x128xf32, #tpu.memory_space<vmem>>, %arg6: memref<128x128xf32, #tpu.memory_space<vmem>>, %arg7: memref<1x128xf32, #tpu.memory_space<vmem>>, %arg8: memref<8x128xf32, #tpu.memory_space<vmem>>, %arg9: memref<8x1024xf32, #tpu.memory_space<vmem>>) attributes {dimension_semantics = [], scalar_prefetch = 0 : i64, scratch_operands = 1 : i64, tpu.core_type = #tpu.core_type<tc>} {
    %c0 = arith.constant 0 : index
    %c0_0 = arith.constant 0 : index
    %0 = vector.load %arg1[%c0, %c0_0] : memref<8x128xf32, #tpu.memory_space<vmem>>, vector<8x128xf32>
    %c0_1 = arith.constant 0 : index
    %c0_2 = arith.constant 0 : index
    %1 = vector.load %arg0[%c0_1, %c0_2] : memref<128x256xf32, #tpu.memory_space<vmem>>, vector<128x256xf32>
    %cst = arith.constant dense<0.000000e+00> : vector<8x256xf32>
    %2 = tpu.matmul %0, %1, %cst {dimension_numbers = #tpu.dot_dimension_numbers<[1], [0], [0], [1], [0, 0, 1, 1], [], []>} : vector<8x128xf32>, vector<128x256xf32>, vector<8x256xf32> -> vector<8x256xf32>
    %cst_3 = arith.constant 0.000000e+00 : f32
    %3 = vector.broadcast %cst_3 : f32 to vector<6x1024xf32>
    %c2 = arith.constant 2 : index
    %c0_4 = arith.constant 0 : index
    %4 = vector.load %arg9[%c2, %c0_4] : memref<8x1024xf32, #tpu.memory_space<vmem>>, vector<6x1024xf32>
    tpu.vector_store %arg9[%c2, %c0_4], %3 {strides = array<i32>} : memref<8x1024xf32, #tpu.memory_space<vmem>>, vector<6x1024xf32>,
    %5 = vector.extract_strided_slice %2 {offsets = [0, 0], sizes = [1, 128], strides = [1, 1]} : vector<8x256xf32> to vector<1x128xf32>
    %c0_5 = arith.constant 0 : index
    %c0_6 = arith.constant 0 : index
    %6 = vector.load %arg9[%c0_5, %c0_6] : memref<8x1024xf32, #tpu.memory_space<vmem>>, vector<1x128xf32>
    tpu.vector_store %arg9[%c0_5, %c0_6], %5 {strides = array<i32>} : memref<8x1024xf32, #tpu.memory_space<vmem>>, vector<1x128xf32>,
    %7 = vector.extract_strided_slice %2 {offsets = [1, 0], sizes = [1, 128], strides = [1, 1]} : vector<8x256xf32> to vector<1x128xf32>
    %c0_7 = arith.constant 0 : index
    %c128 = arith.constant 128 : index
    %8 = vector.load %arg9[%c0_7, %c128] : memref<8x1024xf32, #tpu.memory_space<vmem>>, vector<1x128xf32>
    tpu.vector_store %arg9[%c0_7, %c128], %7 {strides = array<i32>} : memref<8x1024xf32, #tpu.memory_space<vmem>>, vector<1x128xf32>,
    %9 = vector.extract_strided_slice %2 {offsets = [2, 0], sizes = [1, 128], strides = [1, 1]} : vector<8x256xf32> to vector<1x128xf32>
    %c0_8 = arith.constant 0 : index
    %c256 = arith.constant 256 : index
    %10 = vector.load %arg9[%c0_8, %c256] : memref<8x1024xf32, #tpu.memory_space<vmem>>, vector<1x128xf32>
    tpu.vector_store %arg9[%c0_8, %c256], %9 {strides = array<i32>} : memref<8x1024xf32, #tpu.memory_space<vmem>>, vector<1x128xf32>,
    %11 = vector.extract_strided_slice %2 {offsets = [3, 0], sizes = [1, 128], strides = [1, 1]} : vector<8x256xf32> to vector<1x128xf32>
    %c0_9 = arith.constant 0 : index
    %c384 = arith.constant 384 : index
    %12 = vector.load %arg9[%c0_9, %c384] : memref<8x1024xf32, #tpu.memory_space<vmem>>, vector<1x128xf32>
    tpu.vector_store %arg9[%c0_9, %c384], %11 {strides = array<i32>} : memref<8x1024xf32, #tpu.memory_space<vmem>>, vector<1x128xf32>,
    %13 = vector.extract_strided_slice %2 {offsets = [4, 0], sizes = [1, 128], strides = [1, 1]} : vector<8x256xf32> to vector<1x128xf32>
    %c0_10 = arith.constant 0 : index
    %c512 = arith.constant 512 : index
    %14 = vector.load %arg9[%c0_10, %c512] : memref<8x1024xf32, #tpu.memory_space<vmem>>, vector<1x128xf32>
    tpu.vector_store %arg9[%c0_10, %c512], %13 {strides = array<i32>} : memref<8x1024xf32, #tpu.memory_space<vmem>>, vector<1x128xf32>,
    %15 = vector.extract_strided_slice %2 {offsets = [5, 0], sizes = [1, 128], strides = [1, 1]} : vector<8x256xf32> to vector<1x128xf32>
    %c0_11 = arith.constant 0 : index
    %c640 = arith.constant 640 : index
    %16 = vector.load %arg9[%c0_11, %c640] : memref<8x1024xf32, #tpu.memory_space<vmem>>, vector<1x128xf32>
    tpu.vector_store %arg9[%c0_11, %c640], %15 {strides = array<i32>} : memref<8x1024xf32, #tpu.memory_space<vmem>>, vector<1x128xf32>,
    %17 = vector.extract_strided_slice %2 {offsets = [6, 0], sizes = [1, 128], strides = [1, 1]} : vector<8x256xf32> to vector<1x128xf32>
    %c0_12 = arith.constant 0 : index
    %c768 = arith.constant 768 : index
    %18 = vector.load %arg9[%c0_12, %c768] : memref<8x1024xf32, #tpu.memory_space<vmem>>, vector<1x128xf32>
    tpu.vector_store %arg9[%c0_12, %c768], %17 {strides = array<i32>} : memref<8x1024xf32, #tpu.memory_space<vmem>>, vector<1x128xf32>,
    %19 = vector.extract_strided_slice %2 {offsets = [7, 0], sizes = [1, 128], strides = [1, 1]} : vector<8x256xf32> to vector<1x128xf32>
    %c0_13 = arith.constant 0 : index
    %c896 = arith.constant 896 : index
    %20 = vector.load %arg9[%c0_13, %c896] : memref<8x1024xf32, #tpu.memory_space<vmem>>, vector<1x128xf32>
    tpu.vector_store %arg9[%c0_13, %c896], %19 {strides = array<i32>} : memref<8x1024xf32, #tpu.memory_space<vmem>>, vector<1x128xf32>,
    %21 = vector.extract_strided_slice %2 {offsets = [0, 128], sizes = [1, 128], strides = [1, 1]} : vector<8x256xf32> to vector<1x128xf32>
    %c1 = arith.constant 1 : index
    %c0_14 = arith.constant 0 : index
    %22 = vector.load %arg9[%c1, %c0_14] : memref<8x1024xf32, #tpu.memory_space<vmem>>, vector<1x128xf32>
    tpu.vector_store %arg9[%c1, %c0_14], %21 {strides = array<i32>} : memref<8x1024xf32, #tpu.memory_space<vmem>>, vector<1x128xf32>,
    %23 = vector.extract_strided_slice %2 {offsets = [1, 128], sizes = [1, 128], strides = [1, 1]} : vector<8x256xf32> to vector<1x128xf32>
    %c1_15 = arith.constant 1 : index
    %c128_16 = arith.constant 128 : index
    %24 = vector.load %arg9[%c1_15, %c128_16] : memref<8x1024xf32, #tpu.memory_space<vmem>>, vector<1x128xf32>
    tpu.vector_store %arg9[%c1_15, %c128_16], %23 {strides = array<i32>} : memref<8x1024xf32, #tpu.memory_space<vmem>>, vector<1x128xf32>,
    %25 = vector.extract_strided_slice %2 {offsets = [2, 128], sizes = [1, 128], strides = [1, 1]} : vector<8x256xf32> to vector<1x128xf32>
    %c1_17 = arith.constant 1 : index
    %c256_18 = arith.constant 256 : index
    %26 = vector.load %arg9[%c1_17, %c256_18] : memref<8x1024xf32, #tpu.memory_space<vmem>>, vector<1x128xf32>
    tpu.vector_store %arg9[%c1_17, %c256_18], %25 {strides = array<i32>} : memref<8x1024xf32, #tpu.memory_space<vmem>>, vector<1x128xf32>,
    %27 = vector.extract_strided_slice %2 {offsets = [3, 128], sizes = [1, 128], strides = [1, 1]} : vector<8x256xf32> to vector<1x128xf32>
    %c1_19 = arith.constant 1 : index
    %c384_20 = arith.constant 384 : index
    %28 = vector.load %arg9[%c1_19, %c384_20] : memref<8x1024xf32, #tpu.memory_space<vmem>>, vector<1x128xf32>
    tpu.vector_store %arg9[%c1_19, %c384_20], %27 {strides = array<i32>} : memref<8x1024xf32, #tpu.memory_space<vmem>>, vector<1x128xf32>,
    %29 = vector.extract_strided_slice %2 {offsets = [4, 128], sizes = [1, 128], strides = [1, 1]} : vector<8x256xf32> to vector<1x128xf32>
    %c1_21 = arith.constant 1 : index
    %c512_22 = arith.constant 512 : index
    %30 = vector.load %arg9[%c1_21, %c512_22] : memref<8x1024xf32, #tpu.memory_space<vmem>>, vector<1x128xf32>
    tpu.vector_store %arg9[%c1_21, %c512_22], %29 {strides = array<i32>} : memref<8x1024xf32, #tpu.memory_space<vmem>>, vector<1x128xf32>,
    %31 = vector.extract_strided_slice %2 {offsets = [5, 128], sizes = [1, 128], strides = [1, 1]} : vector<8x256xf32> to vector<1x128xf32>
    %c1_23 = arith.constant 1 : index
    %c640_24 = arith.constant 640 : index
    %32 = vector.load %arg9[%c1_23, %c640_24] : memref<8x1024xf32, #tpu.memory_space<vmem>>, vector<1x128xf32>
    tpu.vector_store %arg9[%c1_23, %c640_24], %31 {strides = array<i32>} : memref<8x1024xf32, #tpu.memory_space<vmem>>, vector<1x128xf32>,
    %33 = vector.extract_strided_slice %2 {offsets = [6, 128], sizes = [1, 128], strides = [1, 1]} : vector<8x256xf32> to vector<1x128xf32>
    %c1_25 = arith.constant 1 : index
    %c768_26 = arith.constant 768 : index
    %34 = vector.load %arg9[%c1_25, %c768_26] : memref<8x1024xf32, #tpu.memory_space<vmem>>, vector<1x128xf32>
    tpu.vector_store %arg9[%c1_25, %c768_26], %33 {strides = array<i32>} : memref<8x1024xf32, #tpu.memory_space<vmem>>, vector<1x128xf32>,
    %35 = vector.extract_strided_slice %2 {offsets = [7, 128], sizes = [1, 128], strides = [1, 1]} : vector<8x256xf32> to vector<1x128xf32>
    %c1_27 = arith.constant 1 : index
    %c896_28 = arith.constant 896 : index
    %36 = vector.load %arg9[%c1_27, %c896_28] : memref<8x1024xf32, #tpu.memory_space<vmem>>, vector<1x128xf32>
    tpu.vector_store %arg9[%c1_27, %c896_28], %35 {strides = array<i32>} : memref<8x1024xf32, #tpu.memory_space<vmem>>, vector<1x128xf32>,
    %c0_29 = arith.constant 0 : index
    %c0_30 = arith.constant 0 : index
    %37 = vector.load %arg9[%c0_29, %c0_30] : memref<8x1024xf32, #tpu.memory_space<vmem>>, vector<8x1024xf32>
    %c0_31 = arith.constant 0 : index
    %c0_32 = arith.constant 0 : index
    %38 = vector.load %arg2[%c0_31, %c0_32] : memref<1024x128xf32, #tpu.memory_space<vmem>>, vector<1024x128xf32>
    %cst_33 = arith.constant dense<0.000000e+00> : vector<8x128xf32>
    %39 = tpu.matmul %37, %38, %cst_33 {dimension_numbers = #tpu.dot_dimension_numbers<[1], [0], [0], [1], [0, 0, 1, 1], [], []>} : vector<8x1024xf32>, vector<1024x128xf32>, vector<8x128xf32> -> vector<8x128xf32>
    %c0_34 = arith.constant 0 : index
    %c0_35 = arith.constant 0 : index
    %40 = vector.load %arg3[%c0_34, %c0_35] : memref<1x128xf32, #tpu.memory_space<vmem>>, vector<1x128xf32>
    %41 = vector.broadcast %40 : vector<1x128xf32> to vector<8x128xf32>
    %42 = arith.addf %39, %41 : vector<8x128xf32>
    %cst_36 = arith.constant 0.000000e+00 : f32
    %43 = vector.broadcast %cst_36 : f32 to vector<8x128xf32>
    %44 = arith.maximumf %42, %43 : vector<8x128xf32>
    %c0_37 = arith.constant 0 : index
    %c0_38 = arith.constant 0 : index
    %45 = vector.load %arg4[%c0_37, %c0_38] : memref<128x128xf32, #tpu.memory_space<vmem>>, vector<128x128xf32>
    %cst_39 = arith.constant dense<0.000000e+00> : vector<8x128xf32>
    %46 = tpu.matmul %44, %45, %cst_39 {dimension_numbers = #tpu.dot_dimension_numbers<[1], [0], [0], [1], [0, 0, 1, 1], [], []>} : vector<8x128xf32>, vector<128x128xf32>, vector<8x128xf32> -> vector<8x128xf32>
    %c0_40 = arith.constant 0 : index
    %c0_41 = arith.constant 0 : index
    %47 = vector.load %arg5[%c0_40, %c0_41] : memref<1x128xf32, #tpu.memory_space<vmem>>, vector<1x128xf32>
    %48 = vector.broadcast %47 : vector<1x128xf32> to vector<8x128xf32>
    %49 = arith.addf %46, %48 : vector<8x128xf32>
    %cst_42 = arith.constant 0.000000e+00 : f32
    %50 = vector.broadcast %cst_42 : f32 to vector<8x128xf32>
    %51 = arith.maximumf %49, %50 : vector<8x128xf32>
    %c0_43 = arith.constant 0 : index
    %c0_44 = arith.constant 0 : index
    %52 = vector.load %arg6[%c0_43, %c0_44] : memref<128x128xf32, #tpu.memory_space<vmem>>, vector<128x128xf32>
    %cst_45 = arith.constant dense<0.000000e+00> : vector<8x128xf32>
    %53 = tpu.matmul %51, %52, %cst_45 {dimension_numbers = #tpu.dot_dimension_numbers<[1], [0], [0], [1], [0, 0, 1, 1], [], []>} : vector<8x128xf32>, vector<128x128xf32>, vector<8x128xf32> -> vector<8x128xf32>
    %c0_46 = arith.constant 0 : index
    %c0_47 = arith.constant 0 : index
    %54 = vector.load %arg7[%c0_46, %c0_47] : memref<1x128xf32, #tpu.memory_space<vmem>>, vector<1x128xf32>
    %55 = vector.broadcast %54 : vector<1x128xf32> to vector<8x128xf32>
    %56 = arith.addf %53, %55 : vector<8x128xf32>
    %cst_48 = arith.constant 0.000000e+00 : f32
    %57 = vector.broadcast %cst_48 : f32 to vector<8x128xf32>
    %58 = arith.maximumf %56, %57 : vector<8x128xf32>
    %c0_49 = arith.constant 0 : index
    %c0_50 = arith.constant 0 : index
    %59 = vector.load %arg8[%c0_49, %c0_50] : memref<8x128xf32, #tpu.memory_space<vmem>>, vector<8x128xf32>
    tpu.vector_store %arg8[%c0_49, %c0_50], %58 {strides = array<i32>} : memref<8x128xf32, #tpu.memory_space<vmem>>, vector<8x128xf32>,
    return
  }
}

</mosaic_0001>

<llo_original>
// kernel: tpu_custom_call.1
$region0: #{tpu_custom_call.1}
  #allocation0 [shape = 'u32[]', space=smem, size = 0x4, offset = 0x4, fixed_abs, tag = 'smem constant byte address 0x4 - core index']
  #allocation1 [shape = 'u32[144,128]{1,0:T(1,128)}', space=vmem, size = 0x12000, scoped, tag = 'internal scratch']
  #allocation2 [shape = 'f32[8,1024]{1,0:T(8,128)}', space=vmem, size = 0x8000, scoped, tag = 'scratch operand']
  %s0 = inlined_call_operand.hbm [shape: f32[128,256], index: 0, kind: input, shape index: {}]
  %s1 = inlined_call_operand.hbm [shape: f32[8,128], index: 1, kind: input, shape index: {}]
  %s2 = inlined_call_operand.hbm [shape: f32[1024,128], index: 2, kind: input, shape index: {}]
  %s3 = inlined_call_operand.hbm [shape: f32[1,128], index: 3, kind: input, shape index: {}]
  %s4 = inlined_call_operand.hbm [shape: f32[128,128], index: 4, kind: input, shape index: {}]
  %s5 = inlined_call_operand.hbm [shape: f32[1,128], index: 5, kind: input, shape index: {}]
  %s6 = inlined_call_operand.hbm [shape: f32[128,128], index: 6, kind: input, shape index: {}]
  %s7 = inlined_call_operand.hbm [shape: f32[1,128], index: 7, kind: input, shape index: {}]
  %s8 = inlined_call_operand.hbm [shape: f32[8,128], index: 8, kind: output, shape index: {}]
  %s9 = sld [smem:[#allocation0]]
  $region74: #{tpu_custom_call.1} parent=0
    _
  %s11 = ssub.s32 1, %s9
  %s12 = scalar_select 0, %s11, %s9
  $region1: #{tpu_custom_call.1} parent=0
    #allocation3 [shape = 'u8[131072]{0}', space=vmem, size = 0x20000, scoped, tag = 'input window, operand 0, single buffered']
    #allocation4 [shape = 's32[1]{0}', space=sflag, size = 0x4, scoped, tag = 'scoped memory for tpu_custom_call.1']
    #allocation5 [shape = 's32[1]{0}', space=sflag, size = 0x4, scoped, tag = 'scoped memory for tpu_custom_call.1']
    #allocation6 [shape = 'u8[4096]{0}', space=vmem, size = 0x1000, scoped, tag = 'input window, operand 1, single buffered']
    #allocation7 [shape = 's32[1]{0}', space=sflag, size = 0x4, scoped, tag = 'scoped memory for tpu_custom_call.1']
    #allocation8 [shape = 'u8[524288]{0}', space=vmem, size = 0x80000, scoped, tag = 'input window, operand 2, single buffered']
    #allocation9 [shape = 'u8[512]{0}', space=vmem, size = 0x400, scoped, tag = 'input window, operand 3, single buffered']
    #allocation10 [shape = 's32[1]{0}', space=sflag, size = 0x4, scoped, tag = 'scoped memory for tpu_custom_call.1']
    #allocation11 [shape = 'u8[65536]{0}', space=vmem, size = 0x10000, scoped, tag = 'input window, operand 4, single buffered']
    #allocation12 [shape = 'u8[512]{0}', space=vmem, size = 0x400, scoped, tag = 'input window, operand 5, single buffered']
    #allocation13 [shape = 's32[1]{0}', space=sflag, size = 0x4, scoped, tag = 'scoped memory for tpu_custom_call.1']
    #allocation14 [shape = 'u8[65536]{0}', space=vmem, size = 0x10000, scoped, tag = 'input window, operand 6, single buffered']
    #allocation15 [shape = 'u8[512]{0}', space=vmem, size = 0x400, scoped, tag = 'input window, operand 7, single buffered']
    #allocation16 [shape = 's32[1]{0}', space=sflag, size = 0x4, scoped, tag = 'scoped memory for tpu_custom_call.1']
    #allocation17 [shape = 'u8[4096]{0}', space=vmem, size = 0x1000, scoped, tag = 'output window, operand 0, single buffered']
    %13 = vsyncpa [#allocation4], 0
    %14 = vsyncpa [#allocation7], 0
    %15 = vsyncpa [#allocation10], 0
    %16 = vsyncpa [#allocation13], 0
    %17 = vsyncpa [#allocation16], 0
    %18 = vsyncpa [#allocation5], 0
    // Predicated region
    $region2: #{tpu_custom_call.1} parent=1 // pred_check
      _
    $region3: #{tpu_custom_call.1} parent=1 // pred_check_branch
      %20 = sbr.rel (0) target = $region5
    $region4: #{tpu_custom_call.1} parent=1 // pred_region
      %s22 = ssub.s32 4096, 4096
      %23 = vsyncadd [#allocation4], %s22
      %s24 = sshll.u32 [#allocation3], 4
      %s25 = int_to_ptr.vmem [resolvable:$true] %s24
      %30 = dma.hbm_to_vmem [thread:$0]  %s0, 4096, %s25, [#allocation4], 256, 256, 16
    $region5: #{tpu_custom_call.1} parent=1 // pred_fallthru
      _
    // Predicated region
    $region6: #{tpu_custom_call.1} parent=1 // pred_check
      _
    $region7: #{tpu_custom_call.1} parent=1 // pred_check_branch
      %32 = sbr.rel (0) target = $region9
    $region8: #{tpu_custom_call.1} parent=1 // pred_region
      %s34 = ssub.s32 128, 128
      %35 = vsyncadd [#allocation7], %s34
      %s37 = sshll.u32 [#allocation6], 4
      %s38 = int_to_ptr.vmem [resolvable:$true] %s37
      %40 = dma.hbm_to_vmem [thread:$0]  %s1, 128, %s38, [#allocation7]
    $region9: #{tpu_custom_call.1} parent=1 // pred_fallthru
      _
    // Predicated region
    $region10: #{tpu_custom_call.1} parent=1 // pred_check
      _
    $region11: #{tpu_custom_call.1} parent=1 // pred_check_branch
      %42 = sbr.rel (0) target = $region13
    $region12: #{tpu_custom_call.1} parent=1 // pred_region
      %s44 = ssub.s32 16384, 16384
      %45 = vsyncadd [#allocation7], %s44
      %s46 = sshll.u32 [#allocation8], 4
      %s47 = int_to_ptr.vmem [resolvable:$true] %s46
      %52 = dma.hbm_to_vmem [thread:$0]  %s2, 16384, %s47, [#allocation7], 128, 128, 8
    $region13: #{tpu_custom_call.1} parent=1 // pred_fallthru
      _
    // Predicated region
    $region14: #{tpu_custom_call.1} parent=1 // pred_check
      _
    $region15: #{tpu_custom_call.1} parent=1 // pred_check_branch
      %54 = sbr.rel (0) target = $region17
    $region16: #{tpu_custom_call.1} parent=1 // pred_region
      %s56 = ssub.s32 16, 16
      %57 = vsyncadd [#allocation10], %s56
      %s59 = sshll.u32 [#allocation9], 4
      %s60 = int_to_ptr.vmem [resolvable:$true] %s59
      %62 = dma.hbm_to_vmem [thread:$0]  %s3, 16, %s60, [#allocation10]
    $region17: #{tpu_custom_call.1} parent=1 // pred_fallthru
      _
    // Predicated region
    $region18: #{tpu_custom_call.1} parent=1 // pred_check
      _
    $region19: #{tpu_custom_call.1} parent=1 // pred_check_branch
      %64 = sbr.rel (0) target = $region21
    $region20: #{tpu_custom_call.1} parent=1 // pred_region
      %s66 = ssub.s32 2048, 2048
      %67 = vsyncadd [#allocation10], %s66
      %s68 = sshll.u32 [#allocation11], 4
      %s69 = int_to_ptr.vmem [resolvable:$true] %s68
      %74 = dma.hbm_to_vmem [thread:$0]  %s4, 2048, %s69, [#allocation10], 128, 128, 8
    $region21: #{tpu_custom_call.1} parent=1 // pred_fallthru
      _
    // Predicated region
    $region22: #{tpu_custom_call.1} parent=1 // pred_check
      _
    $region23: #{tpu_custom_call.1} parent=1 // pred_check_branch
      %76 = sbr.rel (0) target = $region25
    $region24: #{tpu_custom_call.1} parent=1 // pred_region
      %s78 = ssub.s32 16, 16
      %79 = vsyncadd [#allocation13], %s78
      %s81 = sshll.u32 [#allocation12], 4
      %s82 = int_to_ptr.vmem [resolvable:$true] %s81
      %84 = dma.hbm_to_vmem [thread:$0]  %s5, 16, %s82, [#allocation13]
    $region25: #{tpu_custom_call.1} parent=1 // pred_fallthru
      _
    // Predicated region
    $region26: #{tpu_custom_call.1} parent=1 // pred_check
      _
    $region27: #{tpu_custom_call.1} parent=1 // pred_check_branch
      %86 = sbr.rel (0) target = $region29
    $region28: #{tpu_custom_call.1} parent=1 // pred_region
      %s88 = ssub.s32 2048, 2048
      %89 = vsyncadd [#allocation13], %s88
      %s90 = sshll.u32 [#allocation14], 4
      %s91 = int_to_ptr.vmem [resolvable:$true] %s90
      %96 = dma.hbm_to_vmem [thread:$0]  %s6, 2048, %s91, [#allocation13], 128, 128, 8
    $region29: #{tpu_custom_call.1} parent=1 // pred_fallthru
      _
    // Predicated region
    $region30: #{tpu_custom_call.1} parent=1 // pred_check
      _
    $region31: #{tpu_custom_call.1} parent=1 // pred_check_branch
      %98 = sbr.rel (0) target = $region33
    $region32: #{tpu_custom_call.1} parent=1 // pred_region
      %s100 = ssub.s32 16, 16
      %101 = vsyncadd [#allocation16], %s100
      %s103 = sshll.u32 [#allocation15], 4
      %s104 = int_to_ptr.vmem [resolvable:$true] %s103
      %106 = dma.hbm_to_vmem [thread:$0]  %s7, 16, %s104, [#allocation16]
    $region33: #{tpu_custom_call.1} parent=1 // pred_fallthru
      _
    // Predicated region
    $region34: #{tpu_custom_call.1} parent=1 // pred_check
      _
    $region35: #{tpu_custom_call.1} parent=1 // pred_check_branch
      %108 = sbr.rel (0) target = $region37
    $region36: #{tpu_custom_call.1} parent=1 // pred_region
      %109 = dma.done [#allocation4], 4096
    $region37: #{tpu_custom_call.1} parent=1 // pred_fallthru
      _
    // Predicated region
    $region38: #{tpu_custom_call.1} parent=1 // pred_check
      _
    $region39: #{tpu_custom_call.1} parent=1 // pred_check_branch
      %111 = sbr.rel (0) target = $region41
    $region40: #{tpu_custom_call.1} parent=1 // pred_region
      %112 = dma.done [#allocation7], 128
    $region41: #{tpu_custom_call.1} parent=1 // pred_fallthru
      _
    // Predicated region
    $region42: #{tpu_custom_call.1} parent=1 // pred_check
      _
    $region43: #{tpu_custom_call.1} parent=1 // pred_check_branch
      %114 = sbr.rel (0) target = $region45
    $region44: #{tpu_custom_call.1} parent=1 // pred_region
      %115 = dma.done [#allocation7], 16384
    $region45: #{tpu_custom_call.1} parent=1 // pred_fallthru
      _
    // Predicated region
    $region46: #{tpu_custom_call.1} parent=1 // pred_check
      _
    $region47: #{tpu_custom_call.1} parent=1 // pred_check_branch
      %117 = sbr.rel (0) target = $region49
    $region48: #{tpu_custom_call.1} parent=1 // pred_region
      %118 = dma.done [#allocation10], 16
    $region49: #{tpu_custom_call.1} parent=1 // pred_fallthru
      _
    // Predicated region
    $region50: #{tpu_custom_call.1} parent=1 // pred_check
      _
    $region51: #{tpu_custom_call.1} parent=1 // pred_check_branch
      %120 = sbr.rel (0) target = $region53
    $region52: #{tpu_custom_call.1} parent=1 // pred_region
      %121 = dma.done [#allocation10], 2048
    $region53: #{tpu_custom_call.1} parent=1 // pred_fallthru
      _
    // Predicated region
    $region54: #{tpu_custom_call.1} parent=1 // pred_check
      _
    $region55: #{tpu_custom_call.1} parent=1 // pred_check_branch
      %123 = sbr.rel (0) target = $region57
    $region56: #{tpu_custom_call.1} parent=1 // pred_region
      %124 = dma.done [#allocation13], 16
    $region57: #{tpu_custom_call.1} parent=1 // pred_fallthru
      _
    // Predicated region
    $region58: #{tpu_custom_call.1} parent=1 // pred_check
      _
    $region59: #{tpu_custom_call.1} parent=1 // pred_check_branch
      %126 = sbr.rel (0) target = $region61
    $region60: #{tpu_custom_call.1} parent=1 // pred_region
      %127 = dma.done [#allocation13], 2048
    $region61: #{tpu_custom_call.1} parent=1 // pred_fallthru
      _
    // Predicated region
    $region62: #{tpu_custom_call.1} parent=1 // pred_check
      _
    $region63: #{tpu_custom_call.1} parent=1 // pred_check_branch
      %129 = sbr.rel (0) target = $region65
    $region64: #{tpu_custom_call.1} parent=1 // pred_region
      %130 = dma.done [#allocation16], 16
    $region65: #{tpu_custom_call.1} parent=1 // pred_fallthru
      _
    %v131 = vld [vmem:[#allocation6] sm:$0xff]
    %v132 = vld [vmem:[#allocation3] sm:$0xff]
    %v133 = vld [vmem:[#allocation3 + $0x8] sm:$0xff]
    %v134 = vld [vmem:[#allocation3 + $0x10] sm:$0xff]
    %v135 = vld [vmem:[#allocation3 + $0x18] sm:$0xff]
    %v136 = vld [vmem:[#allocation3 + $0x20] sm:$0xff]
    %v137 = vld [vmem:[#allocation3 + $0x28] sm:$0xff]
    %v138 = vld [vmem:[#allocation3 + $0x30] sm:$0xff]
    %v139 = vld [vmem:[#allocation3 + $0x38] sm:$0xff]
    %v140 = vld [vmem:[#allocation3 + $0x40] sm:$0xff]
    %v141 = vld [vmem:[#allocation3 + $0x48] sm:$0xff]
    %v142 = vld [vmem:[#allocation3 + $0x50] sm:$0xff]
    %v143 = vld [vmem:[#allocation3 + $0x58] sm:$0xff]
    %v144 = vld [vmem:[#allocation3 + $0x60] sm:$0xff]
    %v145 = vld [vmem:[#allocation3 + $0x68] sm:$0xff]
    %v146 = vld [vmem:[#allocation3 + $0x70] sm:$0xff]
    %v147 = vld [vmem:[#allocation3 + $0x78] sm:$0xff]
    %v148 = vld [vmem:[#allocation3 + $0x80] sm:$0xff]
    %v149 = vld [vmem:[#allocation3 + $0x88] sm:$0xff]
    %v150 = vld [vmem:[#allocation3 + $0x90] sm:$0xff]
    %v151 = vld [vmem:[#allocation3 + $0x98] sm:$0xff]
    %v152 = vld [vmem:[#allocation3 + $0xa0] sm:$0xff]
    %v153 = vld [vmem:[#allocation3 + $0xa8] sm:$0xff]
    %v154 = vld [vmem:[#allocation3 + $0xb0] sm:$0xff]
    %v155 = vld [vmem:[#allocation3 + $0xb8] sm:$0xff]
    %v156 = vld [vmem:[#allocation3 + $0xc0] sm:$0xff]
    %v157 = vld [vmem:[#allocation3 + $0xc8] sm:$0xff]
    %v158 = vld [vmem:[#allocation3 + $0xd0] sm:$0xff]
    %v159 = vld [vmem:[#allocation3 + $0xd8] sm:$0xff]
    %v160 = vld [vmem:[#allocation3 + $0xe0] sm:$0xff]
    %v161 = vld [vmem:[#allocation3 + $0xe8] sm:$0xff]
    %v162 = vld [vmem:[#allocation3 + $0xf0] sm:$0xff]
    %v163 = vld [vmem:[#allocation3 + $0xf8] sm:$0xff]
    %164 = vmatprep.subr.mxu0 %v133
    %165 = vmatpush1.msra.mxu0 %v132
    %166 = vmatprep.subr.mxu0 %v135
    %167 = vmatpush1.msra.mxu0 %v134
    %168 = vmatprep.subr.mxu0 %v137
    %169 = vmatpush1.msra.mxu0 %v136
    %170 = vmatprep.subr.mxu0 %v139
    %171 = vmatpush1.msra.mxu0 %v138
    %172 = vmatprep.subr.mxu0 %v141
    %173 = vmatpush1.msra.mxu0 %v140
    %174 = vmatprep.subr.mxu0 %v143
    %175 = vmatpush1.msra.mxu0 %v142
    %176 = vmatprep.subr.mxu0 %v145
    %177 = vmatpush1.msra.mxu0 %v144
    %178 = vmatprep.subr.mxu0 %v147
    %179 = vmatpush1.msra.mxu0 %v146
    %180 = vmatprep.subr.mxu0 %v149
    %181 = vmatpush1.msra.mxu0 %v148
    %182 = vmatprep.subr.mxu0 %v151
    %183 = vmatpush1.msra.mxu0 %v150
    %184 = vmatprep.subr.mxu0 %v153
    %185 = vmatpush1.msra.mxu0 %v152
    %186 = vmatprep.subr.mxu0 %v155
    %187 = vmatpush1.msra.mxu0 %v154
    %188 = vmatprep.subr.mxu0 %v157
    %189 = vmatpush1.msra.mxu0 %v156
    %190 = vmatprep.subr.mxu0 %v159
    %191 = vmatpush1.msra.mxu0 %v158
    %192 = vmatprep.subr.mxu0 %v161
    %193 = vmatpush1.msra.mxu0 %v160
    %194 = vmatprep.subr.mxu0 %v163
    %195 = vmatpush1.msra.mxu0 %v162
    %196 = vmatprep.subr.mxu0 0.0
    %197 = vmatpush1.msra.mxu0 0.0
    %198 = vmatprep.subr.mxu0 0.0
    %199 = vmatpush1.msra.mxu0 0.0
    %200 = vmatprep.subr.mxu0 0.0
    %201 = vmatpush1.msra.mxu0 0.0
    %202 = vmatprep.subr.mxu0 0.0
    %203 = vmatpush1.msra.mxu0 0.0
    %204 = vmatprep.subr.mxu0 0.0
    %205 = vmatpush1.msra.mxu0 0.0
    %206 = vmatprep.subr.mxu0 0.0
    %207 = vmatpush1.msra.mxu0 0.0
    %208 = vmatprep.subr.mxu0 0.0
    %209 = vmatpush1.msra.mxu0 0.0
    %210 = vmatprep.subr.mxu0 0.0
    %211 = vmatpush1.msra.mxu0 0.0
    %212 = vmatprep.subr.mxu0 0.0
    %213 = vmatpush1.msra.mxu0 0.0
    %214 = vmatprep.subr.mxu0 0.0
    %215 = vmatpush1.msra.mxu0 0.0
    %216 = vmatprep.subr.mxu0 0.0
    %217 = vmatpush1.msra.mxu0 0.0
    %218 = vmatprep.subr.mxu0 0.0
    %219 = vmatpush1.msra.mxu0 0.0
    %220 = vmatprep.subr.mxu0 0.0
    %221 = vmatpush1.msra.mxu0 0.0
    %222 = vmatprep.subr.mxu0 0.0
    %223 = vmatpush1.msra.mxu0 0.0
    %224 = vmatprep.subr.mxu0 0.0
    %225 = vmatpush1.msra.mxu0 0.0
    %226 = vmatprep.subr.mxu0 0.0
    %227 = vmatpush1.msra.mxu0 0.0
    %228 = vmatprep.mubr.f32.mxu0 0.0
    %229 = vmatmul.mubr.f32.gmra.mrb[0].mxu0 %v131
    %v230 = vpop.f32.mrb[0].mxu0
    %v231 = vadd.f32 0.0, %v230
    %v232 = vpop.f32.mrb[0].mxu0
    %v233 = vadd.f32 0.0, %v232
    %234 = vdwg.mxu0
    %235 = vst [vmem:[#allocation2] sm:$0xfc] 0.0
    %236 = vst [vmem:[#allocation2 + $0x8] sm:$0xfc] 0.0
    %237 = vst [vmem:[#allocation2 + $0x10] sm:$0xfc] 0.0
    %238 = vst [vmem:[#allocation2 + $0x18] sm:$0xfc] 0.0
    %239 = vst [vmem:[#allocation2 + $0x20] sm:$0xfc] 0.0
    %240 = vst [vmem:[#allocation2 + $0x28] sm:$0xfc] 0.0
    %241 = vst [vmem:[#allocation2 + $0x30] sm:$0xfc] 0.0
    %242 = vst [vmem:[#allocation2 + $0x38] sm:$0xfc] 0.0
    %243 = vst [vmem:[#allocation2] sm:$0x1] %v231
    %v245 = vrot.slane %v231, 1
    %247 = vst [vmem:[#allocation2 + $0x8] sm:$0x1] %v245
    %v248 = vrot.slane %v231, 2
    %250 = vst [vmem:[#allocation2 + $0x10] sm:$0x1] %v248
    %v251 = vrot.slane %v231, 3
    %253 = vst [vmem:[#allocation2 + $0x18] sm:$0x1] %v251
    %v254 = vrot.slane %v231, 4
    %256 = vst [vmem:[#allocation2 + $0x20] sm:$0x1] %v254
    %v257 = vrot.slane %v231, 5
    %259 = vst [vmem:[#allocation2 + $0x28] sm:$0x1] %v257
    %v260 = vrot.slane %v231, 6
    %262 = vst [vmem:[#allocation2 + $0x30] sm:$0x1] %v260
    %v263 = vrot.slane %v231, 7
    %265 = vst [vmem:[#allocation2 + $0x38] sm:$0x1] %v263
    %266 = vst [vmem:[#allocation2 + $0x1] sm:$0x1] %v233
    %v268 = vrot.slane %v233, 1
    %270 = vst [vmem:[#allocation2 + $0x9] sm:$0x1] %v268
    %v271 = vrot.slane %v233, 2
    %273 = vst [vmem:[#allocation2 + $0x11] sm:$0x1] %v271
    %v274 = vrot.slane %v233, 3
    %276 = vst [vmem:[#allocation2 + $0x19] sm:$0x1] %v274
    %v277 = vrot.slane %v233, 4
    %279 = vst [vmem:[#allocation2 + $0x21] sm:$0x1] %v277
    %v280 = vrot.slane %v233, 5
    %282 = vst [vmem:[#allocation2 + $0x29] sm:$0x1] %v280
    %v283 = vrot.slane %v233, 6
    %285 = vst [vmem:[#allocation2 + $0x31] sm:$0x1] %v283
    %v286 = vrot.slane %v233, 7
    %288 = vst [vmem:[#allocation2 + $0x39] sm:$0x1] %v286
    %v289 = vld [vmem:[#allocation2] sm:$0xff]
    %v290 = vld [vmem:[#allocation2 + $0x8] sm:$0xff]
    %v291 = vld [vmem:[#allocation2 + $0x10] sm:$0xff]
    %v292 = vld [vmem:[#allocation2 + $0x18] sm:$0xff]
    %v293 = vld [vmem:[#allocation2 + $0x20] sm:$0xff]
    %v294 = vld [vmem:[#allocation2 + $0x28] sm:$0xff]
    %v295 = vld [vmem:[#allocation2 + $0x30] sm:$0xff]
    %v296 = vld [vmem:[#allocation2 + $0x38] sm:$0xff]
    %v297 = vld [vmem:[#allocation8] sm:$0xff]
    %v298 = vld [vmem:[#allocation8 + $0x8] sm:$0xff]
    %v299 = vld [vmem:[#allocation8 + $0x10] sm:$0xff]
    %v300 = vld [vmem:[#allocation8 + $0x18] sm:$0xff]
    %v301 = vld [vmem:[#allocation8 + $0x20] sm:$0xff]
    %v302 = vld [vmem:[#allocation8 + $0x28] sm:$0xff]
    %v303 = vld [vmem:[#allocation8 + $0x30] sm:$0xff]
    %v304 = vld [vmem:[#allocation8 + $0x38] sm:$0xff]
    %v305 = vld [vmem:[#allocation8 + $0x40] sm:$0xff]
    %v306 = vld [vmem:[#allocation8 + $0x48] sm:$0xff]
    %v307 = vld [vmem:[#allocation8 + $0x50] sm:$0xff]
    %v308 = vld [vmem:[#allocation8 + $0x58] sm:$0xff]
    %v309 = vld [vmem:[#allocation8 + $0x60] sm:$0xff]
    %v310 = vld [vmem:[#allocation8 + $0x68] sm:$0xff]
    %v311 = vld [vmem:[#allocation8 + $0x70] sm:$0xff]
    %v312 = vld [vmem:[#allocation8 + $0x78] sm:$0xff]
    %v313 = vld [vmem:[#allocation8 + $0x80] sm:$0xff]
    %v314 = vld [vmem:[#allocation8 + $0x88] sm:$0xff]
    %v315 = vld [vmem:[#allocation8 + $0x90] sm:$0xff]
    %v316 = vld [vmem:[#allocation8 + $0x98] sm:$0xff]
    %v317 = vld [vmem:[#allocation8 + $0xa0] sm:$0xff]
    %v318 = vld [vmem:[#allocation8 + $0xa8] sm:$0xff]
    %v319 = vld [vmem:[#allocation8 + $0xb0] sm:$0xff]
    %v320 = vld [vmem:[#allocation8 + $0xb8] sm:$0xff]
    %v321 = vld [vmem:[#allocation8 + $0xc0] sm:$0xff]
    %v322 = vld [vmem:[#allocation8 + $0xc8] sm:$0xff]
    %v323 = vld [vmem:[#allocation8 + $0xd0] sm:$0xff]
    %v324 = vld [vmem:[#allocation8 + $0xd8] sm:$0xff]
    %v325 = vld [vmem:[#allocation8 + $0xe0] sm:$0xff]
    %v326 = vld [vmem:[#allocation8 + $0xe8] sm:$0xff]
    %v327 = vld [vmem:[#allocation8 + $0xf0] sm:$0xff]
    %v328 = vld [vmem:[#allocation8 + $0xf8] sm:$0xff]
    %v329 = vld [vmem:[#allocation8 + $0x100] sm:$0xff]
    %v330 = vld [vmem:[#allocation8 + $0x108] sm:$0xff]
    %v331 = vld [vmem:[#allocation8 + $0x110] sm:$0xff]
    %v332 = vld [vmem:[#allocation8 + $0x118] sm:$0xff]
    %v333 = vld [vmem:[#allocation8 + $0x120] sm:$0xff]
    %v334 = vld [vmem:[#allocation8 + $0x128] sm:$0xff]
    %v335 = vld [vmem:[#allocation8 + $0x130] sm:$0xff]
    %v336 = vld [vmem:[#allocation8 + $0x138] sm:$0xff]
    %v337 = vld [vmem:[#allocation8 + $0x140] sm:$0xff]
    %v338 = vld [vmem:[#allocation8 + $0x148] sm:$0xff]
    %v339 = vld [vmem:[#allocation8 + $0x150] sm:$0xff]
    %v340 = vld [vmem:[#allocation8 + $0x158] sm:$0xff]
    %v341 = vld [vmem:[#allocation8 + $0x160] sm:$0xff]
    %v342 = vld [vmem:[#allocation8 + $0x168] sm:$0xff]
    %v343 = vld [vmem:[#allocation8 + $0x170] sm:$0xff]
    %v344 = vld [vmem:[#allocation8 + $0x178] sm:$0xff]
    %v345 = vld [vmem:[#allocation8 + $0x180] sm:$0xff]
    %v346 = vld [vmem:[#allocation8 + $0x188] sm:$0xff]
    %v347 = vld [vmem:[#allocation8 + $0x190] sm:$0xff]
    %v348 = vld [vmem:[#allocation8 + $0x198] sm:$0xff]
    %v349 = vld [vmem:[#allocation8 + $0x1a0] sm:$0xff]
    %v350 = vld [vmem:[#allocation8 + $0x1a8] sm:$0xff]
    %v351 = vld [vmem:[#allocation8 + $0x1b0] sm:$0xff]
    %v352 = vld [vmem:[#allocation8 + $0x1b8] sm:$0xff]
    %v353 = vld [vmem:[#allocation8 + $0x1c0] sm:$0xff]
    %v354 = vld [vmem:[#allocation8 + $0x1c8] sm:$0xff]
    %v355 = vld [vmem:[#allocation8 + $0x1d0] sm:$0xff]
    %v356 = vld [vmem:[#allocation8 + $0x1d8] sm:$0xff]
    %v357 = vld [vmem:[#allocation8 + $0x1e0] sm:$0xff]
    %v358 = vld [vmem:[#allocation8 + $0x1e8] sm:$0xff]
    %v359 = vld [vmem:[#allocation8 + $0x1f0] sm:$0xff]
    %v360 = vld [vmem:[#allocation8 + $0x1f8] sm:$0xff]
    %v361 = vld [vmem:[#allocation8 + $0x200] sm:$0xff]
    %v362 = vld [vmem:[#allocation8 + $0x208] sm:$0xff]
    %v363 = vld [vmem:[#allocation8 + $0x210] sm:$0xff]
    %v364 = vld [vmem:[#allocation8 + $0x218] sm:$0xff]
    %v365 = vld [vmem:[#allocation8 + $0x220] sm:$0xff]
    %v366 = vld [vmem:[#allocation8 + $0x228] sm:$0xff]
    %v367 = vld [vmem:[#allocation8 + $0x230] sm:$0xff]
    %v368 = vld [vmem:[#allocation8 + $0x238] sm:$0xff]
    %v369 = vld [vmem:[#allocation8 + $0x240] sm:$0xff]
    %v370 = vld [vmem:[#allocation8 + $0x248] sm:$0xff]
    %v371 = vld [vmem:[#allocation8 + $0x250] sm:$0xff]
    %v372 = vld [vmem:[#allocation8 + $0x258] sm:$0xff]
    %v373 = vld [vmem:[#allocation8 + $0x260] sm:$0xff]
    %v374 = vld [vmem:[#allocation8 + $0x268] sm:$0xff]
    %v375 = vld [vmem:[#allocation8 + $0x270] sm:$0xff]
    %v376 = vld [vmem:[#allocation8 + $0x278] sm:$0xff]
    %v377 = vld [vmem:[#allocation8 + $0x280] sm:$0xff]
    %v378 = vld [vmem:[#allocation8 + $0x288] sm:$0xff]
    %v379 = vld [vmem:[#allocation8 + $0x290] sm:$0xff]
    %v380 = vld [vmem:[#allocation8 + $0x298] sm:$0xff]
    %v381 = vld [vmem:[#allocation8 + $0x2a0] sm:$0xff]
    %v382 = vld [vmem:[#allocation8 + $0x2a8] sm:$0xff]
    %v383 = vld [vmem:[#allocation8 + $0x2b0] sm:$0xff]
    %v384 = vld [vmem:[#allocation8 + $0x2b8] sm:$0xff]
    %v385 = vld [vmem:[#allocation8 + $0x2c0] sm:$0xff]
    %v386 = vld [vmem:[#allocation8 + $0x2c8] sm:$0xff]
    %v387 = vld [vmem:[#allocation8 + $0x2d0] sm:$0xff]
    %v388 = vld [vmem:[#allocation8 + $0x2d8] sm:$0xff]
    %v389 = vld [vmem:[#allocation8 + $0x2e0] sm:$0xff]
    %v390 = vld [vmem:[#allocation8 + $0x2e8] sm:$0xff]
    %v391 = vld [vmem:[#allocation8 + $0x2f0] sm:$0xff]
    %v392 = vld [vmem:[#allocation8 + $0x2f8] sm:$0xff]
    %v393 = vld [vmem:[#allocation8 + $0x300] sm:$0xff]
    %v394 = vld [vmem:[#allocation8 + $0x308] sm:$0xff]
    %v395 = vld [vmem:[#allocation8 + $0x310] sm:$0xff]
    %v396 = vld [vmem:[#allocation8 + $0x318] sm:$0xff]
    %v397 = vld [vmem:[#allocation8 + $0x320] sm:$0xff]
    %v398 = vld [vmem:[#allocation8 + $0x328] sm:$0xff]
    %v399 = vld [vmem:[#allocation8 + $0x330] sm:$0xff]
    %v400 = vld [vmem:[#allocation8 + $0x338] sm:$0xff]
    %v401 = vld [vmem:[#allocation8 + $0x340] sm:$0xff]
    %v402 = vld [vmem:[#allocation8 + $0x348] sm:$0xff]
    %v403 = vld [vmem:[#allocation8 + $0x350] sm:$0xff]
    %v404 = vld [vmem:[#allocation8 + $0x358] sm:$0xff]
    %v405 = vld [vmem:[#allocation8 + $0x360] sm:$0xff]
    %v406 = vld [vmem:[#allocation8 + $0x368] sm:$0xff]
    %v407 = vld [vmem:[#allocation8 + $0x370] sm:$0xff]
    %v408 = vld [vmem:[#allocation8 + $0x378] sm:$0xff]
    %v409 = vld [vmem:[#allocation8 + $0x380] sm:$0xff]
    %v410 = vld [vmem:[#allocation8 + $0x388] sm:$0xff]
    %v411 = vld [vmem:[#allocation8 + $0x390] sm:$0xff]
    %v412 = vld [vmem:[#allocation8 + $0x398] sm:$0xff]
    %v413 = vld [vmem:[#allocation8 + $0x3a0] sm:$0xff]
    %v414 = vld [vmem:[#allocation8 + $0x3a8] sm:$0xff]
    %v415 = vld [vmem:[#allocation8 + $0x3b0] sm:$0xff]
    %v416 = vld [vmem:[#allocation8 + $0x3b8] sm:$0xff]
    %v417 = vld [vmem:[#allocation8 + $0x3c0] sm:$0xff]
    %v418 = vld [vmem:[#allocation8 + $0x3c8] sm:$0xff]
    %v419 = vld [vmem:[#allocation8 + $0x3d0] sm:$0xff]
    %v420 = vld [vmem:[#allocation8 + $0x3d8] sm:$0xff]
    %v421 = vld [vmem:[#allocation8 + $0x3e0] sm:$0xff]
    %v422 = vld [vmem:[#allocation8 + $0x3e8] sm:$0xff]
    %v423 = vld [vmem:[#allocation8 + $0x3f0] sm:$0xff]
    %v424 = vld [vmem:[#allocation8 + $0x3f8] sm:$0xff]
    %v425 = vld [vmem:[#allocation9] sm:$0x1]
    %v427 = vlaneseq
    %v428 = vshrl.u32 %v427, 7
    %v429 = vsub.s32 0, %v428
    %v430 = vrot.slane %v425, %v429
    %432 = vmatprep.subr.mxu0 0.0
    %433 = vmatpush1.msra.mxu0 %v297
    %434 = vmatprep.subr.mxu0 0.0
    %435 = vmatpush1.msra.mxu0 %v298
    %436 = vmatprep.subr.mxu0 0.0
    %437 = vmatpush1.msra.mxu0 %v299
    %438 = vmatprep.subr.mxu0 0.0
    %439 = vmatpush1.msra.mxu0 %v300
    %440 = vmatprep.subr.mxu0 0.0
    %441 = vmatpush1.msra.mxu0 %v301
    %442 = vmatprep.subr.mxu0 0.0
    %443 = vmatpush1.msra.mxu0 %v302
    %444 = vmatprep.subr.mxu0 0.0
    %445 = vmatpush1.msra.mxu0 %v303
    %446 = vmatprep.subr.mxu0 0.0
    %447 = vmatpush1.msra.mxu0 %v304
    %448 = vmatprep.subr.mxu0 0.0
    %449 = vmatpush1.msra.mxu0 %v305
    %450 = vmatprep.subr.mxu0 0.0
    %451 = vmatpush1.msra.mxu0 %v306
    %452 = vmatprep.subr.mxu0 0.0
    %453 = vmatpush1.msra.mxu0 %v307
    %454 = vmatprep.subr.mxu0 0.0
    %455 = vmatpush1.msra.mxu0 %v308
    %456 = vmatprep.subr.mxu0 0.0
    %457 = vmatpush1.msra.mxu0 %v309
    %458 = vmatprep.subr.mxu0 0.0
    %459 = vmatpush1.msra.mxu0 %v310
    %460 = vmatprep.subr.mxu0 0.0
    %461 = vmatpush1.msra.mxu0 %v311
    %462 = vmatprep.subr.mxu0 0.0
    %463 = vmatpush1.msra.mxu0 %v312
    %464 = vmatprep.subr.mxu0 0.0
    %465 = vmatpush1.msra.mxu0 %v313
    %466 = vmatprep.subr.mxu0 0.0
    %467 = vmatpush1.msra.mxu0 %v314
    %468 = vmatprep.subr.mxu0 0.0
    %469 = vmatpush1.msra.mxu0 %v315
    %470 = vmatprep.subr.mxu0 0.0
    %471 = vmatpush1.msra.mxu0 %v316
    %472 = vmatprep.subr.mxu0 0.0
    %473 = vmatpush1.msra.mxu0 %v317
    %474 = vmatprep.subr.mxu0 0.0
    %475 = vmatpush1.msra.mxu0 %v318
    %476 = vmatprep.subr.mxu0 0.0
    %477 = vmatpush1.msra.mxu0 %v319
    %478 = vmatprep.subr.mxu0 0.0
    %479 = vmatpush1.msra.mxu0 %v320
    %480 = vmatprep.subr.mxu0 0.0
    %481 = vmatpush1.msra.mxu0 %v321
    %482 = vmatprep.subr.mxu0 0.0
    %483 = vmatpush1.msra.mxu0 %v322
    %484 = vmatprep.subr.mxu0 0.0
    %485 = vmatpush1.msra.mxu0 %v323
    %486 = vmatprep.subr.mxu0 0.0
    %487 = vmatpush1.msra.mxu0 %v324
    %488 = vmatprep.subr.mxu0 0.0
    %489 = vmatpush1.msra.mxu0 %v325
    %490 = vmatprep.subr.mxu0 0.0
    %491 = vmatpush1.msra.mxu0 %v326
    %492 = vmatprep.subr.mxu0 0.0
    %493 = vmatpush1.msra.mxu0 %v327
    %494 = vmatprep.subr.mxu0 0.0
    %495 = vmatpush1.msra.mxu0 %v328
    %496 = vmatprep.mubr.f32.mxu0 %v290
    %497 = vmatmul.mubr.f32.gmra.mrb[0].mxu0 %v289
    %v498 = vpop.f32.mrb[0].mxu0
    %v499 = vadd.f32 %v430, %v498
    %v500 = vpop.f32.mrb[0].mxu0
    %501 = vdwg.mxu0
    %502 = vmatprep.subr.mxu0 0.0
    %503 = vmatpush1.msra.mxu0 %v329
    %504 = vmatprep.subr.mxu0 0.0
    %505 = vmatpush1.msra.mxu0 %v330
    %506 = vmatprep.subr.mxu0 0.0
    %507 = vmatpush1.msra.mxu0 %v331
    %508 = vmatprep.subr.mxu0 0.0
    %509 = vmatpush1.msra.mxu0 %v332
    %510 = vmatprep.subr.mxu0 0.0
    %511 = vmatpush1.msra.mxu0 %v333
    %512 = vmatprep.subr.mxu0 0.0
    %513 = vmatpush1.msra.mxu0 %v334
    %514 = vmatprep.subr.mxu0 0.0
    %515 = vmatpush1.msra.mxu0 %v335
    %516 = vmatprep.subr.mxu0 0.0
    %517 = vmatpush1.msra.mxu0 %v336
    %518 = vmatprep.subr.mxu0 0.0
    %519 = vmatpush1.msra.mxu0 %v337
    %520 = vmatprep.subr.mxu0 0.0
    %521 = vmatpush1.msra.mxu0 %v338
    %522 = vmatprep.subr.mxu0 0.0
    %523 = vmatpush1.msra.mxu0 %v339
    %524 = vmatprep.subr.mxu0 0.0
    %525 = vmatpush1.msra.mxu0 %v340
    %526 = vmatprep.subr.mxu0 0.0
    %527 = vmatpush1.msra.mxu0 %v341
    %528 = vmatprep.subr.mxu0 0.0
    %529 = vmatpush1.msra.mxu0 %v342
    %530 = vmatprep.subr.mxu0 0.0
    %531 = vmatpush1.msra.mxu0 %v343
    %532 = vmatprep.subr.mxu0 0.0
    %533 = vmatpush1.msra.mxu0 %v344
    %534 = vmatprep.subr.mxu0 0.0
    %535 = vmatpush1.msra.mxu0 %v345
    %536 = vmatprep.subr.mxu0 0.0
    %537 = vmatpush1.msra.mxu0 %v346
    %538 = vmatprep.subr.mxu0 0.0
    %539 = vmatpush1.msra.mxu0 %v347
    %540 = vmatprep.subr.mxu0 0.0
    %541 = vmatpush1.msra.mxu0 %v348
    %542 = vmatprep.subr.mxu0 0.0
    %543 = vmatpush1.msra.mxu0 %v349
    %544 = vmatprep.subr.mxu0 0.0
    %545 = vmatpush1.msra.mxu0 %v350
    %546 = vmatprep.subr.mxu0 0.0
    %547 = vmatpush1.msra.mxu0 %v351
    %548 = vmatprep.subr.mxu0 0.0
    %549 = vmatpush1.msra.mxu0 %v352
    %550 = vmatprep.subr.mxu0 0.0
    %551 = vmatpush1.msra.mxu0 %v353
    %552 = vmatprep.subr.mxu0 0.0
    %553 = vmatpush1.msra.mxu0 %v354
    %554 = vmatprep.subr.mxu0 0.0
    %555 = vmatpush1.msra.mxu0 %v355
    %556 = vmatprep.subr.mxu0 0.0
    %557 = vmatpush1.msra.mxu0 %v356
    %558 = vmatprep.subr.mxu0 0.0
    %559 = vmatpush1.msra.mxu0 %v357
    %560 = vmatprep.subr.mxu0 0.0
    %561 = vmatpush1.msra.mxu0 %v358
    %562 = vmatprep.subr.mxu0 0.0
    %563 = vmatpush1.msra.mxu0 %v359
    %564 = vmatprep.subr.mxu0 0.0
    %565 = vmatpush1.msra.mxu0 %v360
    %566 = vmatprep.mubr.f32.mxu0 %v292
    %567 = vmatmul.mubr.f32.gmra.mrb[0].mxu0 %v291
    %v568 = vpop.f32.mrb[0].mxu0
    %v569 = vadd.f32 %v499, %v568
    %v570 = vpop.f32.mrb[0].mxu0
    %571 = vdwg.mxu0
    %572 = vmatprep.subr.mxu0 0.0
    %573 = vmatpush1.msra.mxu0 %v361
    %574 = vmatprep.subr.mxu0 0.0
    %575 = vmatpush1.msra.mxu0 %v362
    %576 = vmatprep.subr.mxu0 0.0
    %577 = vmatpush1.msra.mxu0 %v363
    %578 = vmatprep.subr.mxu0 0.0
    %579 = vmatpush1.msra.mxu0 %v364
    %580 = vmatprep.subr.mxu0 0.0
    %581 = vmatpush1.msra.mxu0 %v365
    %582 = vmatprep.subr.mxu0 0.0
    %583 = vmatpush1.msra.mxu0 %v366
    %584 = vmatprep.subr.mxu0 0.0
    %585 = vmatpush1.msra.mxu0 %v367
    %586 = vmatprep.subr.mxu0 0.0
    %587 = vmatpush1.msra.mxu0 %v368
    %588 = vmatprep.subr.mxu0 0.0
    %589 = vmatpush1.msra.mxu0 %v369
    %590 = vmatprep.subr.mxu0 0.0
    %591 = vmatpush1.msra.mxu0 %v370
    %592 = vmatprep.subr.mxu0 0.0
    %593 = vmatpush1.msra.mxu0 %v371
    %594 = vmatprep.subr.mxu0 0.0
    %595 = vmatpush1.msra.mxu0 %v372
    %596 = vmatprep.subr.mxu0 0.0
    %597 = vmatpush1.msra.mxu0 %v373
    %598 = vmatprep.subr.mxu0 0.0
    %599 = vmatpush1.msra.mxu0 %v374
    %600 = vmatprep.subr.mxu0 0.0
    %601 = vmatpush1.msra.mxu0 %v375
    %602 = vmatprep.subr.mxu0 0.0
    %603 = vmatpush1.msra.mxu0 %v376
    %604 = vmatprep.subr.mxu0 0.0
    %605 = vmatpush1.msra.mxu0 %v377
    %606 = vmatprep.subr.mxu0 0.0
    %607 = vmatpush1.msra.mxu0 %v378
    %608 = vmatprep.subr.mxu0 0.0
    %609 = vmatpush1.msra.mxu0 %v379
    %610 = vmatprep.subr.mxu0 0.0
    %611 = vmatpush1.msra.mxu0 %v380
    %612 = vmatprep.subr.mxu0 0.0
    %613 = vmatpush1.msra.mxu0 %v381
    %614 = vmatprep.subr.mxu0 0.0
    %615 = vmatpush1.msra.mxu0 %v382
    %616 = vmatprep.subr.mxu0 0.0
    %617 = vmatpush1.msra.mxu0 %v383
    %618 = vmatprep.subr.mxu0 0.0
    %619 = vmatpush1.msra.mxu0 %v384
    %620 = vmatprep.subr.mxu0 0.0
    %621 = vmatpush1.msra.mxu0 %v385
    %622 = vmatprep.subr.mxu0 0.0
    %623 = vmatpush1.msra.mxu0 %v386
    %624 = vmatprep.subr.mxu0 0.0
    %625 = vmatpush1.msra.mxu0 %v387
    %626 = vmatprep.subr.mxu0 0.0
    %627 = vmatpush1.msra.mxu0 %v388
    %628 = vmatprep.subr.mxu0 0.0
    %629 = vmatpush1.msra.mxu0 %v389
    %630 = vmatprep.subr.mxu0 0.0
    %631 = vmatpush1.msra.mxu0 %v390
    %632 = vmatprep.subr.mxu0 0.0
    %633 = vmatpush1.msra.mxu0 %v391
    %634 = vmatprep.subr.mxu0 0.0
    %635 = vmatpush1.msra.mxu0 %v392
    %636 = vmatprep.mubr.f32.mxu0 %v294
    %637 = vmatmul.mubr.f32.gmra.mrb[0].mxu0 %v293
    %v638 = vpop.f32.mrb[0].mxu0
    %v639 = vadd.f32 %v569, %v638
    %v640 = vpop.f32.mrb[0].mxu0
    %641 = vdwg.mxu0
    %642 = vmatprep.subr.mxu0 0.0
    %643 = vmatpush1.msra.mxu0 %v393
    %644 = vmatprep.subr.mxu0 0.0
    %645 = vmatpush1.msra.mxu0 %v394
    %646 = vmatprep.subr.mxu0 0.0
    %647 = vmatpush1.msra.mxu0 %v395
    %648 = vmatprep.subr.mxu0 0.0
    %649 = vmatpush1.msra.mxu0 %v396
    %650 = vmatprep.subr.mxu0 0.0
    %651 = vmatpush1.msra.mxu0 %v397
    %652 = vmatprep.subr.mxu0 0.0
    %653 = vmatpush1.msra.mxu0 %v398
    %654 = vmatprep.subr.mxu0 0.0
    %655 = vmatpush1.msra.mxu0 %v399
    %656 = vmatprep.subr.mxu0 0.0
    %657 = vmatpush1.msra.mxu0 %v400
    %658 = vmatprep.subr.mxu0 0.0
    %659 = vmatpush1.msra.mxu0 %v401
    %660 = vmatprep.subr.mxu0 0.0
    %661 = vmatpush1.msra.mxu0 %v402
    %662 = vmatprep.subr.mxu0 0.0
    %663 = vmatpush1.msra.mxu0 %v403
    %664 = vmatprep.subr.mxu0 0.0
    %665 = vmatpush1.msra.mxu0 %v404
    %666 = vmatprep.subr.mxu0 0.0
    %667 = vmatpush1.msra.mxu0 %v405
    %668 = vmatprep.subr.mxu0 0.0
    %669 = vmatpush1.msra.mxu0 %v406
    %670 = vmatprep.subr.mxu0 0.0
    %671 = vmatpush1.msra.mxu0 %v407
    %672 = vmatprep.subr.mxu0 0.0
    %673 = vmatpush1.msra.mxu0 %v408
    %674 = vmatprep.subr.mxu0 0.0
    %675 = vmatpush1.msra.mxu0 %v409
    %676 = vmatprep.subr.mxu0 0.0
    %677 = vmatpush1.msra.mxu0 %v410
    %678 = vmatprep.subr.mxu0 0.0
    %679 = vmatpush1.msra.mxu0 %v411
    %680 = vmatprep.subr.mxu0 0.0
    %681 = vmatpush1.msra.mxu0 %v412
    %682 = vmatprep.subr.mxu0 0.0
    %683 = vmatpush1.msra.mxu0 %v413
    %684 = vmatprep.subr.mxu0 0.0
    %685 = vmatpush1.msra.mxu0 %v414
    %686 = vmatprep.subr.mxu0 0.0
    %687 = vmatpush1.msra.mxu0 %v415
    %688 = vmatprep.subr.mxu0 0.0
    %689 = vmatpush1.msra.mxu0 %v416
    %690 = vmatprep.subr.mxu0 0.0
    %691 = vmatpush1.msra.mxu0 %v417
    %692 = vmatprep.subr.mxu0 0.0
    %693 = vmatpush1.msra.mxu0 %v418
    %694 = vmatprep.subr.mxu0 0.0
    %695 = vmatpush1.msra.mxu0 %v419
    %696 = vmatprep.subr.mxu0 0.0
    %697 = vmatpush1.msra.mxu0 %v420
    %698 = vmatprep.subr.mxu0 0.0
    %699 = vmatpush1.msra.mxu0 %v421
    %700 = vmatprep.subr.mxu0 0.0
    %701 = vmatpush1.msra.mxu0 %v422
    %702 = vmatprep.subr.mxu0 0.0
    %703 = vmatpush1.msra.mxu0 %v423
    %704 = vmatprep.subr.mxu0 0.0
    %705 = vmatpush1.msra.mxu0 %v424
    %706 = vmatprep.mubr.f32.mxu0 %v296
    %707 = vmatmul.mubr.f32.gmra.mrb[0].mxu0 %v295
    %v708 = vpop.f32.mrb[0].mxu0
    %v709 = vadd.f32 %v639, %v708
    %v710 = vpop.f32.mrb[0].mxu0
    %711 = vdwg.mxu0
    %v712 = vmax.f32 %v709, 0.0
    %v713 = vld [vmem:[#allocation11] sm:$0xff]
    %v714 = vld [vmem:[#allocation11 + $0x8] sm:$0xff]
    %v715 = vld [vmem:[#allocation11 + $0x10] sm:$0xff]
    %v716 = vld [vmem:[#allocation11 + $0x18] sm:$0xff]
    %v717 = vld [vmem:[#allocation11 + $0x20] sm:$0xff]
    %v718 = vld [vmem:[#allocation11 + $0x28] sm:$0xff]
    %v719 = vld [vmem:[#allocation11 + $0x30] sm:$0xff]
    %v720 = vld [vmem:[#allocation11 + $0x38] sm:$0xff]
    %v721 = vld [vmem:[#allocation11 + $0x40] sm:$0xff]
    %v722 = vld [vmem:[#allocation11 + $0x48] sm:$0xff]
    %v723 = vld [vmem:[#allocation11 + $0x50] sm:$0xff]
    %v724 = vld [vmem:[#allocation11 + $0x58] sm:$0xff]
    %v725 = vld [vmem:[#allocation11 + $0x60] sm:$0xff]
    %v726 = vld [vmem:[#allocation11 + $0x68] sm:$0xff]
    %v727 = vld [vmem:[#allocation11 + $0x70] sm:$0xff]
    %v728 = vld [vmem:[#allocation11 + $0x78] sm:$0xff]
    %v729 = vld [vmem:[#allocation12] sm:$0x1]
    %v731 = vlaneseq
    %v732 = vshrl.u32 %v731, 7
    %v733 = vsub.s32 0, %v732
    %v734 = vrot.slane %v729, %v733
    %736 = vmatprep.subr.mxu0 0.0
    %737 = vmatpush1.msra.mxu0 %v713
    %738 = vmatprep.subr.mxu0 0.0
    %739 = vmatpush1.msra.mxu0 %v714
    %740 = vmatprep.subr.mxu0 0.0
    %741 = vmatpush1.msra.mxu0 %v715
    %742 = vmatprep.subr.mxu0 0.0
    %743 = vmatpush1.msra.mxu0 %v716
    %744 = vmatprep.subr.mxu0 0.0
    %745 = vmatpush1.msra.mxu0 %v717
    %746 = vmatprep.subr.mxu0 0.0
    %747 = vmatpush1.msra.mxu0 %v718
    %748 = vmatprep.subr.mxu0 0.0
    %749 = vmatpush1.msra.mxu0 %v719
    %750 = vmatprep.subr.mxu0 0.0
    %751 = vmatpush1.msra.mxu0 %v720
    %752 = vmatprep.subr.mxu0 0.0
    %753 = vmatpush1.msra.mxu0 %v721
    %754 = vmatprep.subr.mxu0 0.0
    %755 = vmatpush1.msra.mxu0 %v722
    %756 = vmatprep.subr.mxu0 0.0
    %757 = vmatpush1.msra.mxu0 %v723
    %758 = vmatprep.subr.mxu0 0.0
    %759 = vmatpush1.msra.mxu0 %v724
    %760 = vmatprep.subr.mxu0 0.0
    %761 = vmatpush1.msra.mxu0 %v725
    %762 = vmatprep.subr.mxu0 0.0
    %763 = vmatpush1.msra.mxu0 %v726
    %764 = vmatprep.subr.mxu0 0.0
    %765 = vmatpush1.msra.mxu0 %v727
    %766 = vmatprep.subr.mxu0 0.0
    %767 = vmatpush1.msra.mxu0 %v728
    %768 = vmatprep.subr.mxu0 0.0
    %769 = vmatpush1.msra.mxu0 0.0
    %770 = vmatprep.subr.mxu0 0.0
    %771 = vmatpush1.msra.mxu0 0.0
    %772 = vmatprep.subr.mxu0 0.0
    %773 = vmatpush1.msra.mxu0 0.0
    %774 = vmatprep.subr.mxu0 0.0
    %775 = vmatpush1.msra.mxu0 0.0
    %776 = vmatprep.subr.mxu0 0.0
    %777 = vmatpush1.msra.mxu0 0.0
    %778 = vmatprep.subr.mxu0 0.0
    %779 = vmatpush1.msra.mxu0 0.0
    %780 = vmatprep.subr.mxu0 0.0
    %781 = vmatpush1.msra.mxu0 0.0
    %782 = vmatprep.subr.mxu0 0.0
    %783 = vmatpush1.msra.mxu0 0.0
    %784 = vmatprep.subr.mxu0 0.0
    %785 = vmatpush1.msra.mxu0 0.0
    %786 = vmatprep.subr.mxu0 0.0
    %787 = vmatpush1.msra.mxu0 0.0
    %788 = vmatprep.subr.mxu0 0.0
    %789 = vmatpush1.msra.mxu0 0.0
    %790 = vmatprep.subr.mxu0 0.0
    %791 = vmatpush1.msra.mxu0 0.0
    %792 = vmatprep.subr.mxu0 0.0
    %793 = vmatpush1.msra.mxu0 0.0
    %794 = vmatprep.subr.mxu0 0.0
    %795 = vmatpush1.msra.mxu0 0.0
    %796 = vmatprep.subr.mxu0 0.0
    %797 = vmatpush1.msra.mxu0 0.0
    %798 = vmatprep.subr.mxu0 0.0
    %799 = vmatpush1.msra.mxu0 0.0
    %800 = vmatprep.mubr.f32.mxu0 0.0
    %801 = vmatmul.mubr.f32.gmra.mrb[0].mxu0 %v712
    %v802 = vpop.f32.mrb[0].mxu0
    %v803 = vadd.f32 %v734, %v802
    %v804 = vpop.f32.mrb[0].mxu0
    %805 = vdwg.mxu0
    %v806 = vmax.f32 %v803, 0.0
    %v807 = vld [vmem:[#allocation14] sm:$0xff]
    %v808 = vld [vmem:[#allocation14 + $0x8] sm:$0xff]
    %v809 = vld [vmem:[#allocation14 + $0x10] sm:$0xff]
    %v810 = vld [vmem:[#allocation14 + $0x18] sm:$0xff]
    %v811 = vld [vmem:[#allocation14 + $0x20] sm:$0xff]
    %v812 = vld [vmem:[#allocation14 + $0x28] sm:$0xff]
    %v813 = vld [vmem:[#allocation14 + $0x30] sm:$0xff]
    %v814 = vld [vmem:[#allocation14 + $0x38] sm:$0xff]
    %v815 = vld [vmem:[#allocation14 + $0x40] sm:$0xff]
    %v816 = vld [vmem:[#allocation14 + $0x48] sm:$0xff]
    %v817 = vld [vmem:[#allocation14 + $0x50] sm:$0xff]
    %v818 = vld [vmem:[#allocation14 + $0x58] sm:$0xff]
    %v819 = vld [vmem:[#allocation14 + $0x60] sm:$0xff]
    %v820 = vld [vmem:[#allocation14 + $0x68] sm:$0xff]
    %v821 = vld [vmem:[#allocation14 + $0x70] sm:$0xff]
    %v822 = vld [vmem:[#allocation14 + $0x78] sm:$0xff]
    %v823 = vld [vmem:[#allocation15] sm:$0x1]
    %v825 = vlaneseq
    %v826 = vshrl.u32 %v825, 7
    %v827 = vsub.s32 0, %v826
    %v828 = vrot.slane %v823, %v827
    %830 = vmatprep.subr.mxu0 0.0
    %831 = vmatpush1.msra.mxu0 %v807
    %832 = vmatprep.subr.mxu0 0.0
    %833 = vmatpush1.msra.mxu0 %v808
    %834 = vmatprep.subr.mxu0 0.0
    %835 = vmatpush1.msra.mxu0 %v809
    %836 = vmatprep.subr.mxu0 0.0
    %837 = vmatpush1.msra.mxu0 %v810
    %838 = vmatprep.subr.mxu0 0.0
    %839 = vmatpush1.msra.mxu0 %v811
    %840 = vmatprep.subr.mxu0 0.0
    %841 = vmatpush1.msra.mxu0 %v812
    %842 = vmatprep.subr.mxu0 0.0
    %843 = vmatpush1.msra.mxu0 %v813
    %844 = vmatprep.subr.mxu0 0.0
    %845 = vmatpush1.msra.mxu0 %v814
    %846 = vmatprep.subr.mxu0 0.0
    %847 = vmatpush1.msra.mxu0 %v815
    %848 = vmatprep.subr.mxu0 0.0
    %849 = vmatpush1.msra.mxu0 %v816
    %850 = vmatprep.subr.mxu0 0.0
    %851 = vmatpush1.msra.mxu0 %v817
    %852 = vmatprep.subr.mxu0 0.0
    %853 = vmatpush1.msra.mxu0 %v818
    %854 = vmatprep.subr.mxu0 0.0
    %855 = vmatpush1.msra.mxu0 %v819
    %856 = vmatprep.subr.mxu0 0.0
    %857 = vmatpush1.msra.mxu0 %v820
    %858 = vmatprep.subr.mxu0 0.0
    %859 = vmatpush1.msra.mxu0 %v821
    %860 = vmatprep.subr.mxu0 0.0
    %861 = vmatpush1.msra.mxu0 %v822
    %862 = vmatprep.subr.mxu0 0.0
    %863 = vmatpush1.msra.mxu0 0.0
    %864 = vmatprep.subr.mxu0 0.0
    %865 = vmatpush1.msra.mxu0 0.0
    %866 = vmatprep.subr.mxu0 0.0
    %867 = vmatpush1.msra.mxu0 0.0
    %868 = vmatprep.subr.mxu0 0.0
    %869 = vmatpush1.msra.mxu0 0.0
    %870 = vmatprep.subr.mxu0 0.0
    %871 = vmatpush1.msra.mxu0 0.0
    %872 = vmatprep.subr.mxu0 0.0
    %873 = vmatpush1.msra.mxu0 0.0
    %874 = vmatprep.subr.mxu0 0.0
    %875 = vmatpush1.msra.mxu0 0.0
    %876 = vmatprep.subr.mxu0 0.0
    %877 = vmatpush1.msra.mxu0 0.0
    %878 = vmatprep.subr.mxu0 0.0
    %879 = vmatpush1.msra.mxu0 0.0
    %880 = vmatprep.subr.mxu0 0.0
    %881 = vmatpush1.msra.mxu0 0.0
    %882 = vmatprep.subr.mxu0 0.0
    %883 = vmatpush1.msra.mxu0 0.0
    %884 = vmatprep.subr.mxu0 0.0
    %885 = vmatpush1.msra.mxu0 0.0
    %886 = vmatprep.subr.mxu0 0.0
    %887 = vmatpush1.msra.mxu0 0.0
    %888 = vmatprep.subr.mxu0 0.0
    %889 = vmatpush1.msra.mxu0 0.0
    %890 = vmatprep.subr.mxu0 0.0
    %891 = vmatpush1.msra.mxu0 0.0
    %892 = vmatprep.subr.mxu0 0.0
    %893 = vmatpush1.msra.mxu0 0.0
    %894 = vmatprep.mubr.f32.mxu0 0.0
    %895 = vmatmul.mubr.f32.gmra.mrb[0].mxu0 %v806
    %v896 = vpop.f32.mrb[0].mxu0
    %v897 = vadd.f32 %v828, %v896
    %v898 = vpop.f32.mrb[0].mxu0
    %899 = vdwg.mxu0
    %v900 = vmax.f32 %v897, 0.0
    %901 = vst [vmem:[#allocation17] sm:$0xff] %v900
    // Predicated region
    $region66: #{tpu_custom_call.1} parent=1 // pred_check
      _
    $region67: #{tpu_custom_call.1} parent=1 // pred_check_branch
      %903 = sbr.rel (0) target = $region69
    $region68: #{tpu_custom_call.1} parent=1 // pred_region
      %s905 = ssub.s32 128, 128
      %906 = vsyncadd [#allocation5], %s905
      %s908 = sshll.u32 [#allocation17], 4
      %s909 = int_to_ptr.vmem [resolvable:$true] %s908
      %911 = dma.vmem_to_hbm [thread:$0]  %s909, 128, %s8, [#allocation5]
    $region69: #{tpu_custom_call.1} parent=1 // pred_fallthru
      _
    // Predicated region
    $region70: #{tpu_custom_call.1} parent=1 // pred_check
      _
    $region71: #{tpu_custom_call.1} parent=1 // pred_check_branch
      %913 = sbr.rel (0) target = $region73
    $region72: #{tpu_custom_call.1} parent=1 // pred_region
      %914 = dma.done [#allocation5], 128
    $region73: #{tpu_custom_call.1} parent=1 // pred_fallthru
      _
    %915 = vsyncpa [#allocation4], 1
    %916 = vsyncpa [#allocation7], 1
    %917 = vsyncpa [#allocation10], 1
    %918 = vsyncpa [#allocation13], 1
    %919 = vsyncpa [#allocation16], 1
    %920 = vsyncpa [#allocation5], 1

</llo_original>
